<compile_context>
chip_gen: v7x
topology: tpu7x:2x2x1
jax: 0.10.0
libtpu: 0.0.40
codegen_flags: <defaults>
</compile_context>

<pallas_src>
import functools

import jax
import jax.numpy as jnp
from jax.experimental import pallas as pl
from jax.experimental.pallas import tpu as pltpu

EPS = 1e-5
MOMENTUM = 0.1


# ---------------------------------------------------------------------------
# Generation-aware VMEM budgets and tile-size helpers
# ---------------------------------------------------------------------------
def _round_up(x, m):
    return ((x + m - 1) // m) * m


def _round_down(x, m):
    return (x // m) * m


@functools.lru_cache(maxsize=None)
def _vmem_budgets():
    """Returns (vmem_limit_bytes, per-x-block byte budget), generation aware."""
    cap = 64 * 1024 * 1024                      # conservative default (v7x per-TC VMEM)
    try:
        cap = int(getattr(pltpu.get_tpu_info(), "vmem_capacity_bytes", cap))
    except Exception:
        pass
    cap = max(cap, 32 * 1024 * 1024)
    limit = min((cap * 3) // 4, 96 * 1024 * 1024)   # ~96 MiB on v5e/v6e, ~48 MiB on v7x
    block = max(1 * 1024 * 1024, limit // 8)        # x/out block; ~4x live w/ double-buffer
    return limit, block


def _row_granule(itemsize):
    # Minimum sublane tile: (8,128) f32, (16,128) bf16, (32,128) int8/fp8.
    return {4: 8, 2: 16, 1: 32}.get(int(itemsize), 8)


def _pick_row_tile(R, hw_t, itemsize):
    """Row tile: granule-aligned, fits the block budget, >=2 grid steps if possible."""
    g = _row_granule(itemsize)
    _, budget = _vmem_budgets()
    max_rows = max(g, _round_down(budget // max(hw_t * itemsize, 1), g))
    target = _round_up(pl.cdiv(R, 2), g)      # keep >=2 'parallel' steps (v7x: 2 TCs)
    rt = max(g, min(max_rows, target))
    if rt >= R:
        rt = R                                # single full-extent row block (always legal)
    return rt


def _pick_hw_tile(HW, itemsize):
    """Full HW if a granule-row block fits; else largest mult-of-128 divisor of HW."""
    g = _row_granule(itemsize)
    _, budget = _vmem_budgets()
    if g * HW * itemsize <= budget:
        return HW
    if HW % 128 != 0:
        # TODO(synk): huge HW that is not a multiple of 128 cannot be lane-tiled without
        # masked reductions; fall back to a single full-width block.
        return HW
    max_lanes = max(128, _round_down(budget // (g * itemsize), 128))
    best, t = 128, 128
    top = min(HW, max_lanes)
    while t <= top:
        if HW % t == 0:
            best = t
        t += 128
    return best


def _pad_rows(a, rpad):
    r = a.shape[0]
    if rpad == r:
        return a
    return jnp.pad(a, ((0, rpad - r), (0, 0)))


# ---------------------------------------------------------------------------
# Pallas kernels
# ---------------------------------------------------------------------------
def _row_param(ref, rt):
    """Slice the (rpad, 1) VMEM-resident per-row parameter for this row block."""
    r0 = pl.program_id(0) * rt
    if rt % 8 == 0:
        r0 = pl.multiple_of(r0, 8)
    return ref[pl.ds(r0, rt), :]


def _fused_eval_kernel(x_ref, std_b_ref, mean_b_ref, o_ref, *, eps, rt):
    # x_ref: (rt, HW); std_b/mean_b: (rpad, 1) resident per-row affine params.
    std_b = _row_param(std_b_ref, rt)
    mean_b = _row_param(mean_b_ref, rt)
    x = x_ref[...].astype(jnp.float32)
    hw = x.shape[-1]
    mean = jnp.mean(x, axis=-1, keepdims=True)                        # (rt, 1)
    d = x - mean
    var = jnp.sum(d * d, axis=-1, keepdims=True) * (1.0 / (hw - 1))   # unbiased (ddof=1)
    scale = std_b * jax.lax.rsqrt(var + eps)                          # EUP rsqrt
    o_ref[...] = (d * scale + mean_b).astype(o_ref.dtype)             # reuse centered tensor


def _stats_kernel(x_ref, mean_ref, var_ref, *, hw_total):
    # Per-row mean + unbiased variance, accumulated across HW chunks (grid axis 1,
    # 'arbitrary').  Chan's parallel-variance combine keeps good numerics; the
    # resident output blocks double as the accumulators.
    j = pl.program_id(1)
    x = x_ref[...].astype(jnp.float32)
    nc = x.shape[-1]
    mc = jnp.mean(x, axis=-1, keepdims=True)
    d = x - mc
    m2c = jnp.sum(d * d, axis=-1, keepdims=True)

    @pl.when(j == 0)
    def _():
        mean_ref[...] = mc
        var_ref[...] = m2c                    # running M2

    @pl.when(j > 0)
    def _():
        n = (j * nc).astype(jnp.float32)
        delta = mc - mean_ref[...]
        w = nc / (n + nc)
        mean_ref[...] = mean_ref[...] + delta * w
        var_ref[...] = var_ref[...] + m2c + (delta * delta) * (n * w)

    @pl.when(j == pl.num_programs(1) - 1)
    def _():
        var_ref[...] = var_ref[...] * (1.0 / (hw_total - 1))


def _apply_kernel(x_ref, scale_ref, shift_ref, o_ref, *, rt):
    # Pure FMA: o = x * scale + shift  (scale/shift per-row, VMEM-resident).
    scale = _row_param(scale_ref, rt)
    shift = _row_param(shift_ref, rt)
    x = x_ref[...].astype(jnp.float32)
    o_ref[...] = (x * scale + shift).astype(o_ref.dtype)


# ---------------------------------------------------------------------------
# pallas_call wrappers
# ---------------------------------------------------------------------------
def _fused_eval(x2, std_b_row, mean_b_row, eps):
    R, HW = x2.shape
    itemsize = int(jnp.dtype(x2.dtype).itemsize)
    limit, _ = _vmem_budgets()
    rt = _pick_row_tile(R, HW, itemsize)
    nr = pl.cdiv(R, rt)
    rpad = nr * rt
    std_b_p = _pad_rows(std_b_row.astype(jnp.float32), rpad)
    mean_b_p = _pad_rows(mean_b_row.astype(jnp.float32), rpad)
    return pl.pallas_call(
        functools.partial(_fused_eval_kernel, eps=eps, rt=rt),
        out_shape=jax.ShapeDtypeStruct((R, HW), x2.dtype),
        grid=(nr,),
        in_specs=[
            pl.BlockSpec((rt, HW), lambda i: (i, 0)),      # x (read once from HBM)
            pl.BlockSpec((rpad, 1), lambda i: (0, 0)),     # std_b: resident, fetched once
            pl.BlockSpec((rpad, 1), lambda i: (0, 0)),     # mean_b: resident, fetched once
        ],
        out_specs=pl.BlockSpec((rt, HW), lambda i: (i, 0)),
        compiler_params=pltpu.CompilerParams(
            dimension_semantics=("parallel",),
            vmem_limit_bytes=limit),
    )(x2, std_b_p, mean_b_p)


def _per_row_stats(x2):
    R, HW = x2.shape
    itemsize = int(jnp.dtype(x2.dtype).itemsize)
    limit, _ = _vmem_budgets()
    hw_t = _pick_hw_tile(HW, itemsize)
    rt = _pick_row_tile(R, hw_t, itemsize)
    nr = pl.cdiv(R, rt)
    nh = HW // hw_t
    return pl.pallas_call(
        functools.partial(_stats_kernel, hw_total=HW),
        out_shape=(jax.ShapeDtypeStruct((R, 1), jnp.float32),
                   jax.ShapeDtypeStruct((R, 1), jnp.float32)),
        grid=(nr, nh),
        in_specs=[pl.BlockSpec((rt, hw_t), lambda i, j: (i, j))],
        out_specs=(pl.BlockSpec((rt, 1), lambda i, j: (i, 0)),
                   pl.BlockSpec((rt, 1), lambda i, j: (i, 0))),
        compiler_params=pltpu.CompilerParams(
            dimension_semantics=("parallel", "arbitrary"),
            vmem_limit_bytes=limit),
    )(x2)


def _apply(x2, scale_row, shift_row):
    R, HW = x2.shape
    itemsize = int(jnp.dtype(x2.dtype).itemsize)
    limit, _ = _vmem_budgets()
    hw_t = _pick_hw_tile(HW, itemsize)
    rt = _pick_row_tile(R, hw_t, itemsize)
    nr = pl.cdiv(R, rt)
    nh = HW // hw_t
    rpad = nr * rt
    scale_p = _pad_rows(scale_row.astype(jnp.float32), rpad)
    shift_p = _pad_rows(shift_row.astype(jnp.float32), rpad)
    return pl.pallas_call(
        functools.partial(_apply_kernel, rt=rt),
        out_shape=jax.ShapeDtypeStruct((R, HW), x2.dtype),
        grid=(nr, nh),
        in_specs=[
            pl.BlockSpec((rt, hw_t), lambda i, j: (i, j)),   # x
            pl.BlockSpec((rpad, 1), lambda i, j: (0, 0)),    # scale: resident
            pl.BlockSpec((rpad, 1), lambda i, j: (0, 0)),    # shift: resident
        ],
        out_specs=pl.BlockSpec((rt, hw_t), lambda i, j: (i, j)),
        compiler_params=pltpu.CompilerParams(
            dimension_semantics=("parallel", "parallel"),
            vmem_limit_bytes=limit),
    )(x2, scale_p, shift_p)


# ---------------------------------------------------------------------------
# StyleNormal forward
# ---------------------------------------------------------------------------
def style_normal(x, running_mean, running_var, *, training=False,
                 eps=EPS, momentum=MOMENTUM):
    """Forward pass of StyleNormal.

    x            : (N, C, H, W)
    running_mean : (32, C, 1, 1) buffer
    running_var  : (32, C, 1, 1) buffer
    Returns (output, new_running_mean, new_running_var).
    """
    N, C, H, W = x.shape
    HW = H * W
    assert HW > 1, "StyleNormal needs H*W > 1 (unbiased variance divides by HW-1)"
    R = N * C
    x2 = x.reshape(R, HW)
    itemsize = int(jnp.dtype(x2.dtype).itemsize)

    if training:
        # Pass 1: per-(n, c) stats (Pallas, HW-chunked when needed).
        mean, var = _per_row_stats(x2)                       # (R, 1) fp32 each
        mean_nc = mean.reshape(N, C)
        var_nc = var.reshape(N, C)
        std_nc = jnp.sqrt(var_nc + eps)

        # Batch style statistics (tiny, plain JAX).
        std_b = jnp.mean(std_nc, axis=0)                     # (C,)
        mean_b = jnp.mean(mean_nc, axis=0)                   # (C,)

        # Fold affine:  out = (x - mean)/std * std_b + mean_b = x*scale + shift
        scale_nc = std_b[None, :] / std_nc                   # (N, C)
        shift_nc = mean_b[None, :] - mean_nc * scale_nc      # (N, C)

        # Running-buffer updates.  PyTorch does copy_ with a broadcast of the
        # (N, C, 1, 1) stats into the (32, C, 1, 1) buffer => N must be 32 (or 1),
        # exactly as in the original module.
        # NOTE: the module multiplies the already-unbiased var by HW/(HW-1) again;
        # we replicate that behaviour to keep forward semantics identical.
        mean4 = mean_nc.reshape(N, C, 1, 1)
        unbias_var4 = (var_nc * HW / (HW - 1)).reshape(N, C, 1, 1)
        new_running_mean = (1 - momentum) * running_mean + momentum * mean4
        new_running_var = (1 - momentum) * running_var + momentum * unbias_var4
        # TODO(synk): PyTorch mutates the buffers in place (copy_); updated buffers
        # are returned functionally here instead.
        # TODO(synk): for tiny activations the stats+apply passes could be fused into one
        # pallas_call holding x resident in VMEM (saves one HBM read of x).

        # Pass 2: streaming FMA apply (Pallas).
        out2 = _apply(x2, scale_nc.reshape(R, 1), shift_nc.reshape(R, 1))
        return out2.reshape(N, C, H, W), new_running_mean, new_running_var

    # Eval: std_b/mean_b come only from the running buffers.
    std_b_c = jnp.mean(jnp.sqrt(running_var + eps), axis=0).reshape(C)   # (C,)
    mean_b_c = jnp.mean(running_mean, axis=0).reshape(C)                 # (C,)
    std_b_row = jnp.broadcast_to(std_b_c[None, :], (N, C)).reshape(R, 1)
    mean_b_row = jnp.broadcast_to(mean_b_c[None, :], (N, C)).reshape(R, 1)

    g = _row_granule(itemsize)
    _, budget = _vmem_budgets()
    if g * HW * itemsize <= budget:
        # Single fused pass over x (stats + normalize + affine).
        out2 = _fused_eval(x2, std_b_row, mean_b_row, eps)
    else:
        # Large-HW fallback: chunked stats + streaming FMA apply (two HBM passes).
        mean, var = _per_row_stats(x2)
        scale_row = std_b_row * jax.lax.rsqrt(var + eps)
        shift_row = mean_b_row - mean * scale_row
        out2 = _apply(x2, scale_row, shift_row)
    return out2.reshape(N, C, H, W), running_mean, running_var


# ---------------------------------------------------------------------------
# Pure-JAX references for verification
# ---------------------------------------------------------------------------
def _ref_eval(x, running_mean, running_var, eps=EPS):
    N, C, H, W = x.shape
    xr = x.reshape(N, C, -1)
    var_ = jnp.var(xr, axis=2, ddof=1)
    std_ = jnp.sqrt(var_ + eps).reshape(N, C, 1, 1)
    mean_ = jnp.mean(xr, axis=2).reshape(N, C, 1, 1)
    normal = (x - mean_) / std_
    std_b = jnp.mean(jnp.sqrt(running_var + eps), axis=0, keepdims=True)
    mean_b = jnp.mean(running_mean, axis=0, keepdims=True)
    return normal * std_b + mean_b


def _ref_train(x, running_mean, running_var, eps=EPS, momentum=MOMENTUM):
    N, C, H, W = x.shape
    xr = x.reshape(N, C, -1)
    var = jnp.var(xr, axis=2, ddof=1)
    std = jnp.sqrt(var + eps).reshape(N, C, 1, 1)
    mean = jnp.mean(xr, axis=2).reshape(N, C, 1, 1)
    normal = (x - mean) / std
    new_rm = (1 - momentum) * running_mean + momentum * mean
    unbias_var = (var * (H * W) / (H * W - 1)).reshape(N, C, 1, 1)
    new_rv = (1 - momentum) * running_var + momentum * unbias_var
    std_b = jnp.mean(std, axis=0, keepdims=True)
    mean_b = jnp.mean(mean, axis=0, keepdims=True)
    return normal * std_b + mean_b, new_rm, new_rv


if __name__ == "__main__":
    key = jax.random.PRNGKey(0)
    C = 4
    # Deterministic buffer init, exactly as the module's __init__:
    running_mean = jnp.zeros((32, C, 1, 1), dtype=jnp.float32)
    running_var = jnp.ones((32, C, 1, 1), dtype=jnp.float32)

    # ---- eval mode: fused single-pass kernel ------------------------------
    N, H, W = 2, 16, 16
    x = jax.random.normal(key, (N, C, H, W), dtype=jnp.float32)
    out, rm, rv = style_normal(x, running_mean, running_var, training=False)
    out = jax.block_until_ready(out)
    ref = _ref_eval(x, running_mean, running_var)
    assert out.shape == (N, C, H, W)
    assert jnp.allclose(out, ref, atol=1e-4, rtol=1e-4), "eval mismatch vs reference"

    # ---- training mode: stats kernel + FMA apply kernel -------------------
    # (N must be 32 so the running-buffer broadcast matches the PyTorch copy_.)
    xt = jax.random.normal(jax.random.PRNGKey(0), (32, C, H, W), dtype=jnp.float32)
    out_t, rm_t, rv_t = style_normal(xt, running_mean, running_var, training=True)
    out_t = jax.block_until_ready(out_t)
    ref_t, ref_rm, ref_rv = _ref_train(xt, running_mean, running_var)
    assert jnp.allclose(out_t, ref_t, atol=1e-4, rtol=1e-4), "train out mismatch"
    assert jnp.allclose(rm_t, ref_rm, atol=1e-5, rtol=1e-5), "running_mean mismatch"
    assert jnp.allclose(rv_t, ref_rv, atol=1e-5, rtol=1e-5), "running_var mismatch"

    print("KERNEL_OK")
</pallas_src>

<mosaic_0001>
module attributes {stable_mosaic.version = 11 : i64} {
  func.func @_fused_eval_kernel(%arg0: i32, %arg1: memref<8x256xf32, #tpu.memory_space<vmem>>, %arg2: memref<8x1xf32, #tpu.memory_space<vmem>>, %arg3: memref<8x1xf32, #tpu.memory_space<vmem>>, %arg4: memref<8x256xf32, #tpu.memory_space<vmem>>) attributes {dimension_semantics = [#tpu.dimension_semantics<parallel>], iteration_bounds = array<i64: 1>, scalar_prefetch = 0 : i64, scratch_operands = 0 : i64, tpu.core_type = #tpu.core_type<tc>, window_params = [{transform_indices = @transform_0, window_bounds = array<i64: 8, 256>}, {pipeline_mode = #tpu.pipeline_mode<synchronous>, transform_indices = @transform_1, window_bounds = array<i64: 8, 1>}, {pipeline_mode = #tpu.pipeline_mode<synchronous>, transform_indices = @transform_2, window_bounds = array<i64: 8, 1>}, {transform_indices = @transform_3, window_bounds = array<i64: 8, 256>}]} {
    %c8_i32 = arith.constant 8 : i32
    %0 = arith.muli %arg0, %c8_i32 : i32
    %1 = tpu.assume_multiple %0, 8 : i32
    %2 = arith.index_cast %1 : i32 to index
    %c0 = arith.constant 0 : index
    %3 = vector.load %arg2[%2, %c0] : memref<8x1xf32, #tpu.memory_space<vmem>>, vector<8x1xf32>
    %c8_i32_0 = arith.constant 8 : i32
    %4 = arith.muli %arg0, %c8_i32_0 : i32
    %5 = tpu.assume_multiple %4, 8 : i32
    %6 = arith.index_cast %5 : i32 to index
    %c0_1 = arith.constant 0 : index
    %7 = vector.load %arg3[%6, %c0_1] : memref<8x1xf32, #tpu.memory_space<vmem>>, vector<8x1xf32>
    %c0_2 = arith.constant 0 : index
    %c0_3 = arith.constant 0 : index
    %8 = vector.load %arg1[%c0_2, %c0_3] : memref<8x256xf32, #tpu.memory_space<vmem>>, vector<8x256xf32>
    %cst = arith.constant dense<0.000000e+00> : vector<8xf32>
    %9 = vector.multi_reduction <add>, %8, %cst [1] : vector<8x256xf32> to vector<8xf32>
    %10 = vector.shape_cast %9 : vector<8xf32> to vector<8x1xf32>
    %cst_4 = arith.constant 2.560000e+02 : f32
    %11 = vector.broadcast %cst_4 : f32 to vector<8x1xf32>
    %12 = arith.divf %10, %11 : vector<8x1xf32>
    %13 = vector.broadcast %12 : vector<8x1xf32> to vector<8x256xf32>
    %14 = arith.subf %8, %13 : vector<8x256xf32>
    %15 = arith.mulf %14, %14 : vector<8x256xf32>
    %cst_5 = arith.constant dense<0.000000e+00> : vector<8xf32>
    %16 = vector.multi_reduction <add>, %15, %cst_5 [1] : vector<8x256xf32> to vector<8xf32>
    %17 = vector.shape_cast %16 : vector<8xf32> to vector<8x1xf32>
    %cst_6 = arith.constant 0.00392156886 : f32
    %18 = vector.broadcast %cst_6 : f32 to vector<8x1xf32>
    %19 = arith.mulf %17, %18 : vector<8x1xf32>
    %cst_7 = arith.constant 9.99999974E-6 : f32
    %20 = vector.broadcast %cst_7 : f32 to vector<8x1xf32>
    %21 = arith.addf %19, %20 : vector<8x1xf32>
    %22 = math.rsqrt %21 : vector<8x1xf32>
    %23 = arith.mulf %3, %22 : vector<8x1xf32>
    %24 = vector.broadcast %23 : vector<8x1xf32> to vector<8x256xf32>
    %25 = arith.mulf %14, %24 : vector<8x256xf32>
    %26 = vector.broadcast %7 : vector<8x1xf32> to vector<8x256xf32>
    %27 = arith.addf %25, %26 : vector<8x256xf32>
    %c0_8 = arith.constant 0 : index
    %c0_9 = arith.constant 0 : index
    %28 = vector.load %arg4[%c0_8, %c0_9] : memref<8x256xf32, #tpu.memory_space<vmem>>, vector<8x256xf32>
    tpu.vector_store %arg4[%c0_8, %c0_9], %27 {strides = array<i32>} : memref<8x256xf32, #tpu.memory_space<vmem>>, vector<8x256xf32>,
    return
  }
  func.func @transform_0(%arg0: i32) -> (i32, i32) {
    %c0_i32 = arith.constant 0 : i32
    %c0_i32_0 = arith.constant 0 : i32
    return %arg0, %c0_i32 : i32, i32
  }
  func.func @transform_1(%arg0: i32) -> (i32, i32) {
    %c0_i32 = arith.constant 0 : i32
    %c0_i32_0 = arith.constant 0 : i32
    %c0_i32_1 = arith.constant 0 : i32
    return %c0_i32, %c0_i32_0 : i32, i32
  }
  func.func @transform_2(%arg0: i32) -> (i32, i32) {
    %c0_i32 = arith.constant 0 : i32
    %c0_i32_0 = arith.constant 0 : i32
    %c0_i32_1 = arith.constant 0 : i32
    return %c0_i32, %c0_i32_0 : i32, i32
  }
  func.func @transform_3(%arg0: i32) -> (i32, i32) {
    %c0_i32 = arith.constant 0 : i32
    %c0_i32_0 = arith.constant 0 : i32
    return %arg0, %c0_i32 : i32, i32
  }
}

</mosaic_0001>

<llo_original>
// kernel: tpu_custom_call.1
$region0: #{tpu_custom_call.1}
  #allocation0 [shape = 'u32[]', space=smem, size = 0x4, offset = 0x4, fixed_abs, tag = 'smem constant byte address 0x4 - core index']
  #allocation1 [shape = 'u32[144,128]{1,0:T(1,128)}', space=vmem, size = 0x12000, scoped, tag = 'internal scratch']
  %s0 = inlined_call_operand.vmem [shape: f32[8,256], index: 0, kind: input, shape index: {}]
  %s1 = inlined_call_operand.vmem [shape: f32[8,1], index: 1, kind: input, shape index: {}]
  %s2 = inlined_call_operand.vmem [shape: f32[8,1], index: 2, kind: input, shape index: {}]
  %s3 = inlined_call_operand.hbm [shape: f32[8,256], index: 3, kind: output, shape index: {}]
  %s4 = sld [smem:[#allocation0]]
  $region22: #{tpu_custom_call.1} parent=0
    _
  %s6 = ssub.s32 1, %s4
  %s7 = scalar_select 0, %s6, %s4
  $region1: #{tpu_custom_call.1} parent=0
    #allocation2 [shape = 'u8[8192]{0}', space=vmem, size = 0x2000, scoped, tag = 'output window, operand 0, single buffered']
    #allocation3 [shape = 's32[1]{0}', space=sflag, size = 0x4, scoped, tag = 'scoped memory for tpu_custom_call.1']
    %8 = vsyncpa [#allocation3], 0
    // Predicated region
    $region2: #{tpu_custom_call.1} parent=1 // pred_check
      _
    $region3: #{tpu_custom_call.1} parent=1 // pred_check_branch
      %10 = sbr.rel (0) target = $region5
    $region4: #{tpu_custom_call.1} parent=1 // pred_region
      _
    $region5: #{tpu_custom_call.1} parent=1 // pred_fallthru
      _
    // Predicated region
    $region6: #{tpu_custom_call.1} parent=1 // pred_check
      _
    $region7: #{tpu_custom_call.1} parent=1 // pred_check_branch
      %12 = sbr.rel (0) target = $region9
    $region8: #{tpu_custom_call.1} parent=1 // pred_region
      _
    $region9: #{tpu_custom_call.1} parent=1 // pred_fallthru
      _
    // Predicated region
    $region10: #{tpu_custom_call.1} parent=1 // pred_check
      _
    $region11: #{tpu_custom_call.1} parent=1 // pred_check_branch
      %14 = sbr.rel (0) target = $region13
    $region12: #{tpu_custom_call.1} parent=1 // pred_region
      _
    $region13: #{tpu_custom_call.1} parent=1 // pred_fallthru
      _
    %s15 = smul.u32 0, 8
    %s16 = scalar_lea.vmem %s1, %s15
    %v17 = vld [vmem:[%s16] sm:$0xff]
    %s18 = scalar_lea.vmem %s2, %s15
    %v19 = vld [vmem:[%s18] sm:$0xff]
    %v20 = vld [vmem:[%s0] sm:$0xff]
    %v21 = vld [vmem:[%s0 + $0x8] sm:$0xff]
    %v22 = vadd.f32 %v20, %v21
    %23 = vadd.xlane.f32.xlu0 %v22
    %v24 = vpop.xlane.xlu0 %23
    %v25 = vrcp.pop 256.0
    %v26 = vmul.f32 %v24, %v25
    %v27 = vsub.f32 %v20, %v26
    %v28 = vsub.f32 %v21, %v26
    %v29 = vmul.f32 %v27, %v27
    %v30 = vmul.f32 %v28, %v28
    %v31 = vadd.f32 %v29, %v30
    %32 = vadd.xlane.f32.xlu0 %v31
    %v33 = vpop.xlane.xlu0 %32
    %v34 = vmul.f32 %v33, 0.003921569
    %v35 = vadd.f32 %v34, 1e-05
    %v36 = vrsqrt.pop %v35
    %v37 = vmul.f32 %v17, %v36
    %39 = vset.pattern.permute.xlu0 0
    %40 = vperm.xlu0 %39, %v37
    %v41 = vpop.permute.xlu0 %40
    %v43 = vmul.f32 %v27, %v41
    %v44 = vmul.f32 %v28, %v41
    %46 = vset.pattern.permute.xlu0 0
    %47 = vperm.xlu0 %46, %v19
    %v48 = vpop.permute.xlu0 %47
    %v50 = vadd.f32 %v43, %v48
    %v51 = vadd.f32 %v44, %v48
    %52 = vst [vmem:[#allocation2] sm:$0xff] %v50
    %53 = vst [vmem:[#allocation2 + $0x8] sm:$0xff] %v51
    // Predicated region
    $region14: #{tpu_custom_call.1} parent=1 // pred_check
      _
    $region15: #{tpu_custom_call.1} parent=1 // pred_check_branch
      %55 = sbr.rel (0) target = $region17
    $region16: #{tpu_custom_call.1} parent=1 // pred_region
      %s57 = ssub.s32 256, 256
      %58 = vsyncadd [#allocation3], %s57
      %s60 = sshll.u32 [#allocation2], 4
      %s61 = int_to_ptr.vmem [resolvable:$true] %s60
      %63 = dma.vmem_to_hbm [thread:$0]  %s61, 256, %s3, [#allocation3]
    $region17: #{tpu_custom_call.1} parent=1 // pred_fallthru
      _
    // Predicated region
    $region18: #{tpu_custom_call.1} parent=1 // pred_check
      _
    $region19: #{tpu_custom_call.1} parent=1 // pred_check_branch
      %65 = sbr.rel (0) target = $region21
    $region20: #{tpu_custom_call.1} parent=1 // pred_region
      %66 = dma.done [#allocation3], 256
    $region21: #{tpu_custom_call.1} parent=1 // pred_fallthru
      _
    %67 = vsyncpa [#allocation3], 1

</llo_original>
